<compile_context>
chip_gen: v5e
topology: v5e:2x2
jax: 0.10.0
libtpu: 0.0.40
codegen_flags: <defaults>
</compile_context>

<pallas_src>
import jax
import jax.numpy as jnp
from jax.experimental import pallas as pl
from jax.experimental.pallas import tpu as pltpu


def _nl_block_kernel(x_ref, xp_cf_ref, xp_tok_ref,
                     wt_ref, bt_ref,
                     wpt_ref, bp_ref,
                     wg_ref, bg_ref,
                     wo_ref, bo_ref,
                     out_ref,
                     phi_t_scr, g_scr):
    f32 = jnp.float32
    bf16 = jnp.bfloat16

    # Once per batch sample (first N tile): phi^T (M, Ci) and g (Ci, M) from the pooled
    # input, cached in VMEM scratch that persists across the N-tile axis.
    @pl.when(pl.program_id(1) == 0)
    def _():
        phi_t = jnp.dot(xp_tok_ref[0], wpt_ref[...],
                        preferred_element_type=f32) + bp_ref[...]           # (M, Ci)
        g = jnp.dot(wg_ref[...], xp_cf_ref[0],
                    preferred_element_type=f32) + bg_ref[...]               # (Ci, M)
        phi_t_scr[...] = phi_t.astype(bf16)
        g_scr[...] = g.astype(bf16)

    x = x_ref[0]                                                            # (C, TN) f32

    # theta (Ci, TN); the softmax scale is already folded into wt/bt by the wrapper.
    theta = jnp.dot(wt_ref[...], x.astype(bf16),
                    preferred_element_type=f32) + bt_ref[...]

    # scores^T (M, TN): scores_t[m, n] = sum_c phi[c, m] * theta[c, n]
    scores_t = jnp.dot(phi_t_scr[...], theta.astype(bf16),
                       preferred_element_type=f32)

    # Softmax over M (sublane axis), kept in f32; normalization deferred past PV matmul.
    s_max = jnp.max(scores_t, axis=0, keepdims=True)                        # (1, TN)
    e = jnp.exp(scores_t - s_max)                                           # (M, TN)
    denom = jnp.sum(e, axis=0, keepdims=True)                               # (1, TN)

    # PV: t (Ci, TN) = g @ softmax(scores), normalization applied afterwards per column.
    t_un = jnp.dot(g_scr[...], e.astype(bf16), preferred_element_type=f32)  # (Ci, TN)
    t = t_un * pl.reciprocal(denom, approx=True)

    # Output 1x1x1 conv (frozen-BN affine folded into wo/bo) + residual add in f32.
    y = jnp.dot(wo_ref[...], t.astype(bf16), preferred_element_type=f32) + bo_ref[...]
    out_ref[0] = (y + x).astype(out_ref.dtype)


def _pick_tile_n(n, cap):
    """Largest multiple of 128 that divides n and is <= cap (fallback: whole n)."""
    if n % 128 != 0:
        return n
    best = 128
    t = 256
    while t <= min(n, cap):
        if n % t == 0:
            best = t
        t += 128
    return min(best, n)


def nl_block_forward(x, params, *, tile_n=256):
    """x: (B, C, T, H, W) float32, NCDHW as in PyTorch. Returns (B, C, T, H, W)."""
    B, C, T, H, W = x.shape
    assert H % 2 == 0 and W % 2 == 0, "MaxPool3d((1,2,2), stride (1,2,2)) path assumes even H, W"
    dim_inner = params["w_theta"].shape[0]
    dim_out = params["w_out"].shape[0]
    assert dim_out == C, "residual `out + x` requires dim_out == dim_in"

    N = T * H * W
    M = T * (H // 2) * (W // 2)
    tn = _pick_tile_n(N, tile_n)
    grid = (B, N // tn)

    f32, bf16 = jnp.float32, jnp.bfloat16
    x_flat = x.reshape(B, C, N)

    # TODO(synk): MaxPool3d((1,2,2)) stays in XLA glue; doing it in-kernel would need the
    # whole sample resident, which conflicts with the N tiling. The pooled tensor is cast
    # to bf16 (halves its HBM traffic) and shipped in both layouts so phi^T and g are both
    # native-orientation matmuls (no in-kernel transposes).
    xp = x.reshape(B, C, T, H // 2, 2, W // 2, 2).max(axis=(4, 6)).reshape(B, C, M)
    xp_cf = xp.astype(bf16)                       # (B, C, M)
    xp_tok = jnp.swapaxes(xp_cf, 1, 2)            # (B, M, C)

    # Fold the softmax scale into theta and the frozen-BN affine into the output conv.
    scale = float(dim_inner) ** (-0.5)
    bn_scale = params["bn_weight"] / jnp.sqrt(params["bn_running_var"] + 1e-5)
    bn_bias = params["bn_bias"] - params["bn_running_mean"] * bn_scale

    wt = (params["w_theta"] * scale).astype(bf16)                           # (Ci, C)
    bt = (params["b_theta"] * scale).reshape(-1, 1).astype(f32)             # (Ci, 1)
    wpt = params["w_phi"].T.astype(bf16)                                    # (C, Ci)
    bp = params["b_phi"].reshape(1, -1).astype(f32)                         # (1, Ci)
    wg = params["w_g"].astype(bf16)                                         # (Ci, C)
    bg = params["b_g"].reshape(-1, 1).astype(f32)                           # (Ci, 1)
    wo = (params["w_out"] * bn_scale[:, None]).astype(bf16)                 # (Co, Ci)
    bo = (params["b_out"] * bn_scale + bn_bias).reshape(-1, 1).astype(f32)  # (Co, 1)
    weight_args = [wt, bt, wpt, bp, wg, bg, wo, bo]

    def full_spec(a):
        # small parameter array, whole thing resident every grid step
        return pl.BlockSpec(a.shape, lambda b, n: (0,) * a.ndim)

    in_specs = (
        [pl.BlockSpec((1, C, tn), lambda b, n: (b, 0, n)),   # x tile, new each step
         pl.BlockSpec((1, C, M), lambda b, n: (b, 0, 0)),    # pooled x (channels-first), per sample
         pl.BlockSpec((1, M, C), lambda b, n: (b, 0, 0))]    # pooled x (tokens-first), per sample
        + [full_spec(a) for a in weight_args]
    )

    out_flat = pl.pallas_call(
        _nl_block_kernel,
        out_shape=jax.ShapeDtypeStruct((B, dim_out, N), x.dtype),
        grid_spec=pltpu.PrefetchScalarGridSpec(
            num_scalar_prefetch=0,
            grid=grid,
            in_specs=in_specs,
            out_specs=pl.BlockSpec((1, dim_out, tn), lambda b, n: (b, 0, n)),
            scratch_shapes=[pltpu.VMEM((M, dim_inner), bf16),   # phi^T
                            pltpu.VMEM((dim_inner, M), bf16)],  # g
        ),
        compiler_params=pltpu.CompilerParams(
            # N-tile axis must be 'arbitrary' (phi/g scratch carries across it);
            # batch axis is 'parallel' for megacore sharding.
            dimension_semantics=("parallel", "arbitrary"),
            # Explicit scoped-VMEM budget: above the 16/32 MiB defaults, but below v7x's
            # 64 MiB physical VMEM so the same kernel compiles on v5e/v6e/v7x.
            vmem_limit_bytes=56 * 1024 * 1024,
        ),
    )(x_flat, xp_cf, xp_tok, *weight_args)

    return out_flat.reshape(B, dim_out, T, H, W)


def init_params(key, dim_in, dim_out, dim_inner, init_std=0.01):
    """Deterministic init matching NLBlock.__init__ (synthetic, no checkpoint)."""
    ks = jax.random.split(key, 4)
    return {
        "w_theta": init_std * jax.random.normal(ks[0], (dim_inner, dim_in), jnp.float32),
        "b_theta": jnp.zeros((dim_inner,), jnp.float32),
        "w_phi": init_std * jax.random.normal(ks[1], (dim_inner, dim_in), jnp.float32),
        "b_phi": jnp.zeros((dim_inner,), jnp.float32),
        "w_g": init_std * jax.random.normal(ks[2], (dim_inner, dim_in), jnp.float32),
        "b_g": jnp.zeros((dim_inner,), jnp.float32),
        "w_out": init_std * jax.random.normal(ks[3], (dim_out, dim_inner), jnp.float32),
        "b_out": jnp.zeros((dim_out,), jnp.float32),
        # NLBlock.__init__: nn.init.constant_(self.bn.weight, 0.0); FrozenBatchNorm3d buffers:
        # bias=0, running_mean=0, running_var=1  (so at init the block is an identity residual)
        "bn_weight": jnp.zeros((dim_out,), jnp.float32),
        "bn_bias": jnp.zeros((dim_out,), jnp.float32),
        "bn_running_mean": jnp.zeros((dim_out,), jnp.float32),
        "bn_running_var": jnp.ones((dim_out,), jnp.float32),
    }


def nl_block_reference(x, params):
    """Pure-JAX f32 reference of the PyTorch forward (group=False, FROZEN_BN=True)."""
    B, C, T, H, W = x.shape
    N = T * H * W
    M = T * (H // 2) * (W // 2)
    dim_inner = params["w_theta"].shape[0]
    x_flat = x.reshape(B, C, N)
    xp_flat = x.reshape(B, C, T, H // 2, 2, W // 2, 2).max(axis=(4, 6)).reshape(B, C, M)

    def conv(w, b, v):
        return jnp.einsum("oc,bck->bok", w, v) + b[None, :, None]

    theta = conv(params["w_theta"], params["b_theta"], x_flat)
    phi = conv(params["w_phi"], params["b_phi"], xp_flat)
    g = conv(params["w_g"], params["b_g"], xp_flat)
    tp = jnp.einsum("bcn,bcm->bnm", theta, phi) * (float(dim_inner) ** (-0.5))
    p = jax.nn.softmax(tp, axis=2)
    t = jnp.einsum("bcm,bnm->bcn", g, p)
    y = conv(params["w_out"], params["b_out"], t)
    bn_scale = params["bn_weight"] / jnp.sqrt(params["bn_running_var"] + 1e-5)
    bn_bias = params["bn_bias"] - params["bn_running_mean"] * bn_scale
    y = bn_scale[None, :, None] * y + bn_bias[None, :, None]
    return (y + x_flat).reshape(B, C, T, H, W)


if __name__ == "__main__":
    key = jax.random.PRNGKey(0)
    kx, kp = jax.random.split(key)

    # Small demo shapes: B=2, dim_in=dim_out=16, dim_inner=8, T=2, H=W=16
    #   -> N = 512 tokens (2 tiles of 256), M = 128 pooled tokens (lane/sublane friendly).
    B, C, T, H, W = 2, 16, 2, 16, 16
    dim_inner = 8
    x = jax.random.normal(kx, (B, C, T, H, W), jnp.float32)
    params = init_params(kp, C, C, dim_inner)

    out = jax.block_until_ready(nl_block_forward(x, params, tile_n=256))
    ref = nl_block_reference(x, params)
    assert out.shape == (B, C, T, H, W)
    # Module-faithful init has bn.weight == 0 -> identity residual; exact match expected.
    assert jnp.allclose(out, ref, atol=1e-5, rtol=1e-5), "mismatch vs reference (init params)"

    # Exercise the non-trivial attention path too (nonzero BN weight, bf16 matmul path).
    params_nz = dict(params, bn_weight=jnp.ones((C,), jnp.float32))
    out_nz = jax.block_until_ready(nl_block_forward(x, params_nz, tile_n=256))
    ref_nz = nl_block_reference(x, params_nz)
    assert jnp.allclose(out_nz, ref_nz, atol=2e-3, rtol=2e-3), "mismatch vs reference (bn=1)"

    print("KERNEL_OK")
</pallas_src>

<mosaic_0001>
module attributes {stable_mosaic.version = 11 : i64} {
  func.func @_nl_block_kernel(%arg0: i32, %arg1: i32, %arg2: memref<1x16x256xf32, #tpu.memory_space<vmem>>, %arg3: memref<1x16x128xbf16, #tpu.memory_space<vmem>>, %arg4: memref<1x128x16xbf16, #tpu.memory_space<vmem>>, %arg5: memref<8x16xbf16, #tpu.memory_space<vmem>>, %arg6: memref<8x1xf32, #tpu.memory_space<vmem>>, %arg7: memref<16x8xbf16, #tpu.memory_space<vmem>>, %arg8: memref<1x8xf32, #tpu.memory_space<vmem>>, %arg9: memref<8x16xbf16, #tpu.memory_space<vmem>>, %arg10: memref<8x1xf32, #tpu.memory_space<vmem>>, %arg11: memref<16x8xbf16, #tpu.memory_space<vmem>>, %arg12: memref<16x1xf32, #tpu.memory_space<vmem>>, %arg13: memref<1x16x256xf32, #tpu.memory_space<vmem>>, %arg14: memref<128x8xbf16, #tpu.memory_space<vmem>>, %arg15: memref<8x128xbf16, #tpu.memory_space<vmem>>) attributes {dimension_semantics = [#tpu.dimension_semantics<parallel>, #tpu.dimension_semantics<arbitrary>], iteration_bounds = array<i64: 2, 2>, scalar_prefetch = 0 : i64, scratch_operands = 2 : i64, tpu.core_type = #tpu.core_type<tc>, window_params = [{transform_indices = @transform_0, window_bounds = array<i64: 1, 16, 256>}, {transform_indices = @transform_1, window_bounds = array<i64: 1, 16, 128>}, {transform_indices = @transform_2, window_bounds = array<i64: 1, 128, 16>}, {pipeline_mode = #tpu.pipeline_mode<synchronous>, transform_indices = @transform_3, window_bounds = array<i64: 8, 16>}, {pipeline_mode = #tpu.pipeline_mode<synchronous>, transform_indices = @transform_4, window_bounds = array<i64: 8, 1>}, {pipeline_mode = #tpu.pipeline_mode<synchronous>, transform_indices = @transform_5, window_bounds = array<i64: 16, 8>}, {pipeline_mode = #tpu.pipeline_mode<synchronous>, transform_indices = @transform_6, window_bounds = array<i64: 1, 8>}, {pipeline_mode = #tpu.pipeline_mode<synchronous>, transform_indices = @transform_7, window_bounds = array<i64: 8, 16>}, {pipeline_mode = #tpu.pipeline_mode<synchronous>, transform_indices = @transform_8, window_bounds = array<i64: 8, 1>}, {pipeline_mode = #tpu.pipeline_mode<synchronous>, transform_indices = @transform_9, window_bounds = array<i64: 16, 8>}, {pipeline_mode = #tpu.pipeline_mode<synchronous>, transform_indices = @transform_10, window_bounds = array<i64: 16, 1>}, {transform_indices = @transform_11, window_bounds = array<i64: 1, 16, 256>}]} {
    %c0_i32 = arith.constant 0 : i32
    %0 = arith.cmpi eq, %arg1, %c0_i32 : i32
    %1 = arith.extui %0 : i1 to i32
    %c0_i32_0 = arith.constant 0 : i32
    %2 = arith.cmpi ne, %1, %c0_i32_0 : i32
    scf.if %2 {
      %c0_23 = arith.constant 0 : index
      %c0_24 = arith.constant 0 : index
      %c0_25 = arith.constant 0 : index
      %37 = vector.load %arg4[%c0_23, %c0_24, %c0_25] : memref<1x128x16xbf16, #tpu.memory_space<vmem>>, vector<1x128x16xbf16>
      %38 = vector.shape_cast %37 : vector<1x128x16xbf16> to vector<128x16xbf16>
      %c0_26 = arith.constant 0 : index
      %c0_27 = arith.constant 0 : index
      %39 = vector.load %arg7[%c0_26, %c0_27] : memref<16x8xbf16, #tpu.memory_space<vmem>>, vector<16x8xbf16>
      %cst_28 = arith.constant dense<0.000000e+00> : vector<128x8xf32>
      %40 = tpu.matmul %38, %39, %cst_28 {dimension_numbers = #tpu.dot_dimension_numbers<[1], [0], [0], [1], [0, 0, 1, 1], [], []>} : vector<128x16xbf16>, vector<16x8xbf16>, vector<128x8xf32> -> vector<128x8xf32>
      %c0_29 = arith.constant 0 : index
      %c0_30 = arith.constant 0 : index
      %41 = vector.load %arg8[%c0_29, %c0_30] : memref<1x8xf32, #tpu.memory_space<vmem>>, vector<1x8xf32>
      %42 = vector.broadcast %41 : vector<1x8xf32> to vector<128x8xf32>
      %43 = arith.addf %40, %42 : vector<128x8xf32>
      %c0_31 = arith.constant 0 : index
      %c0_32 = arith.constant 0 : index
      %44 = vector.load %arg9[%c0_31, %c0_32] : memref<8x16xbf16, #tpu.memory_space<vmem>>, vector<8x16xbf16>
      %c0_33 = arith.constant 0 : index
      %c0_34 = arith.constant 0 : index
      %c0_35 = arith.constant 0 : index
      %45 = vector.load %arg3[%c0_33, %c0_34, %c0_35] : memref<1x16x128xbf16, #tpu.memory_space<vmem>>, vector<1x16x128xbf16>
      %46 = vector.shape_cast %45 : vector<1x16x128xbf16> to vector<16x128xbf16>
      %cst_36 = arith.constant dense<0.000000e+00> : vector<8x128xf32>
      %47 = tpu.matmul %44, %46, %cst_36 {dimension_numbers = #tpu.dot_dimension_numbers<[1], [0], [0], [1], [0, 0, 1, 1], [], []>} : vector<8x16xbf16>, vector<16x128xbf16>, vector<8x128xf32> -> vector<8x128xf32>
      %c0_37 = arith.constant 0 : index
      %c0_38 = arith.constant 0 : index
      %48 = vector.load %arg10[%c0_37, %c0_38] : memref<8x1xf32, #tpu.memory_space<vmem>>, vector<8x1xf32>
      %49 = vector.broadcast %48 : vector<8x1xf32> to vector<8x128xf32>
      %50 = arith.addf %47, %49 : vector<8x128xf32>
      %51 = arith.truncf %43 : vector<128x8xf32> to vector<128x8xbf16>
      %c0_39 = arith.constant 0 : index
      %c0_40 = arith.constant 0 : index
      %52 = vector.load %arg14[%c0_39, %c0_40] : memref<128x8xbf16, #tpu.memory_space<vmem>>, vector<128x8xbf16>
      tpu.vector_store %arg14[%c0_39, %c0_40], %51 {strides = array<i32>} : memref<128x8xbf16, #tpu.memory_space<vmem>>, vector<128x8xbf16>,
      %53 = arith.truncf %50 : vector<8x128xf32> to vector<8x128xbf16>
      %c0_41 = arith.constant 0 : index
      %c0_42 = arith.constant 0 : index
      %54 = vector.load %arg15[%c0_41, %c0_42] : memref<8x128xbf16, #tpu.memory_space<vmem>>, vector<8x128xbf16>
      tpu.vector_store %arg15[%c0_41, %c0_42], %53 {strides = array<i32>} : memref<8x128xbf16, #tpu.memory_space<vmem>>, vector<8x128xbf16>,
    } else {
    }
    %c0 = arith.constant 0 : index
    %c0_1 = arith.constant 0 : index
    %c0_2 = arith.constant 0 : index
    %3 = vector.load %arg2[%c0, %c0_1, %c0_2] : memref<1x16x256xf32, #tpu.memory_space<vmem>>, vector<1x16x256xf32>
    %4 = vector.shape_cast %3 : vector<1x16x256xf32> to vector<16x256xf32>
    %c0_3 = arith.constant 0 : index
    %c0_4 = arith.constant 0 : index
    %5 = vector.load %arg5[%c0_3, %c0_4] : memref<8x16xbf16, #tpu.memory_space<vmem>>, vector<8x16xbf16>
    %6 = arith.truncf %4 : vector<16x256xf32> to vector<16x256xbf16>
    %cst = arith.constant dense<0.000000e+00> : vector<8x256xf32>
    %7 = tpu.matmul %5, %6, %cst {dimension_numbers = #tpu.dot_dimension_numbers<[1], [0], [0], [1], [0, 0, 1, 1], [], []>} : vector<8x16xbf16>, vector<16x256xbf16>, vector<8x256xf32> -> vector<8x256xf32>
    %c0_5 = arith.constant 0 : index
    %c0_6 = arith.constant 0 : index
    %8 = vector.load %arg6[%c0_5, %c0_6] : memref<8x1xf32, #tpu.memory_space<vmem>>, vector<8x1xf32>
    %9 = vector.broadcast %8 : vector<8x1xf32> to vector<8x256xf32>
    %10 = arith.addf %7, %9 : vector<8x256xf32>
    %c0_7 = arith.constant 0 : index
    %c0_8 = arith.constant 0 : index
    %11 = vector.load %arg14[%c0_7, %c0_8] : memref<128x8xbf16, #tpu.memory_space<vmem>>, vector<128x8xbf16>
    %12 = arith.truncf %10 : vector<8x256xf32> to vector<8x256xbf16>
    %cst_9 = arith.constant dense<0.000000e+00> : vector<128x256xf32>
    %13 = tpu.matmul %11, %12, %cst_9 {dimension_numbers = #tpu.dot_dimension_numbers<[1], [0], [0], [1], [0, 0, 1, 1], [], []>} : vector<128x8xbf16>, vector<8x256xbf16>, vector<128x256xf32> -> vector<128x256xf32>
    %cst_10 = arith.constant dense<0xFF800000> : vector<256xf32>
    %14 = vector.multi_reduction <maximumf>, %13, %cst_10 [0] : vector<128x256xf32> to vector<256xf32>
    %15 = vector.shape_cast %14 : vector<256xf32> to vector<1x256xf32>
    %16 = vector.broadcast %15 : vector<1x256xf32> to vector<128x256xf32>
    %17 = arith.subf %13, %16 : vector<128x256xf32>
    %18 = math.exp %17 : vector<128x256xf32>
    %cst_11 = arith.constant dense<0.000000e+00> : vector<256xf32>
    %19 = vector.multi_reduction <add>, %18, %cst_11 [0] : vector<128x256xf32> to vector<256xf32>
    %20 = vector.shape_cast %19 : vector<256xf32> to vector<1x256xf32>
    %c0_12 = arith.constant 0 : index
    %c0_13 = arith.constant 0 : index
    %21 = vector.load %arg15[%c0_12, %c0_13] : memref<8x128xbf16, #tpu.memory_space<vmem>>, vector<8x128xbf16>
    %22 = arith.truncf %18 : vector<128x256xf32> to vector<128x256xbf16>
    %cst_14 = arith.constant dense<0.000000e+00> : vector<8x256xf32>
    %23 = tpu.matmul %21, %22, %cst_14 {dimension_numbers = #tpu.dot_dimension_numbers<[1], [0], [0], [1], [0, 0, 1, 1], [], []>} : vector<8x128xbf16>, vector<128x256xbf16>, vector<8x256xf32> -> vector<8x256xf32>
    %24 = tpu.reciprocal %20 {approx = true} : vector<1x256xf32> -> vector<1x256xf32>
    %25 = vector.broadcast %24 : vector<1x256xf32> to vector<8x256xf32>
    %26 = arith.mulf %23, %25 : vector<8x256xf32>
    %c0_15 = arith.constant 0 : index
    %c0_16 = arith.constant 0 : index
    %27 = vector.load %arg11[%c0_15, %c0_16] : memref<16x8xbf16, #tpu.memory_space<vmem>>, vector<16x8xbf16>
    %28 = arith.truncf %26 : vector<8x256xf32> to vector<8x256xbf16>
    %cst_17 = arith.constant dense<0.000000e+00> : vector<16x256xf32>
    %29 = tpu.matmul %27, %28, %cst_17 {dimension_numbers = #tpu.dot_dimension_numbers<[1], [0], [0], [1], [0, 0, 1, 1], [], []>} : vector<16x8xbf16>, vector<8x256xbf16>, vector<16x256xf32> -> vector<16x256xf32>
    %c0_18 = arith.constant 0 : index
    %c0_19 = arith.constant 0 : index
    %30 = vector.load %arg12[%c0_18, %c0_19] : memref<16x1xf32, #tpu.memory_space<vmem>>, vector<16x1xf32>
    %31 = vector.broadcast %30 : vector<16x1xf32> to vector<16x256xf32>
    %32 = arith.addf %29, %31 : vector<16x256xf32>
    %33 = arith.addf %32, %4 : vector<16x256xf32>
    %c0_20 = arith.constant 0 : index
    %c0_21 = arith.constant 0 : index
    %c0_22 = arith.constant 0 : index
    %34 = vector.load %arg13[%c0_20, %c0_21, %c0_22] : memref<1x16x256xf32, #tpu.memory_space<vmem>>, vector<1x16x256xf32>
    %35 = vector.shape_cast %34 : vector<1x16x256xf32> to vector<16x256xf32>
    %36 = vector.shape_cast %33 : vector<16x256xf32> to vector<1x16x256xf32>
    tpu.vector_store %arg13[%c0_20, %c0_21, %c0_22], %36 {strides = array<i32>} : memref<1x16x256xf32, #tpu.memory_space<vmem>>, vector<1x16x256xf32>,
    return
  }
  func.func @transform_0(%arg0: i32, %arg1: i32) -> (i32, i32, i32) {
    %c0_i32 = arith.constant 0 : i32
    %c0_i32_0 = arith.constant 0 : i32
    return %arg0, %c0_i32, %arg1 : i32, i32, i32
  }
  func.func @transform_1(%arg0: i32, %arg1: i32) -> (i32, i32, i32) {
    %c0_i32 = arith.constant 0 : i32
    %c0_i32_0 = arith.constant 0 : i32
    %c0_i32_1 = arith.constant 0 : i32
    return %arg0, %c0_i32, %c0_i32_0 : i32, i32, i32
  }
  func.func @transform_2(%arg0: i32, %arg1: i32) -> (i32, i32, i32) {
    %c0_i32 = arith.constant 0 : i32
    %c0_i32_0 = arith.constant 0 : i32
    %c0_i32_1 = arith.constant 0 : i32
    return %arg0, %c0_i32, %c0_i32_0 : i32, i32, i32
  }
  func.func @transform_3(%arg0: i32, %arg1: i32) -> (i32, i32) {
    %c0_i32 = arith.constant 0 : i32
    %c0_i32_0 = arith.constant 0 : i32
    %c0_i32_1 = arith.constant 0 : i32
    return %c0_i32, %c0_i32_0 : i32, i32
  }
  func.func @transform_4(%arg0: i32, %arg1: i32) -> (i32, i32) {
    %c0_i32 = arith.constant 0 : i32
    %c0_i32_0 = arith.constant 0 : i32
    %c0_i32_1 = arith.constant 0 : i32
    return %c0_i32, %c0_i32_0 : i32, i32
  }
  func.func @transform_5(%arg0: i32, %arg1: i32) -> (i32, i32) {
    %c0_i32 = arith.constant 0 : i32
    %c0_i32_0 = arith.constant 0 : i32
    %c0_i32_1 = arith.constant 0 : i32
    return %c0_i32, %c0_i32_0 : i32, i32
  }
  func.func @transform_6(%arg0: i32, %arg1: i32) -> (i32, i32) {
    %c0_i32 = arith.constant 0 : i32
    %c0_i32_0 = arith.constant 0 : i32
    %c0_i32_1 = arith.constant 0 : i32
    return %c0_i32, %c0_i32_0 : i32, i32
  }
  func.func @transform_7(%arg0: i32, %arg1: i32) -> (i32, i32) {
    %c0_i32 = arith.constant 0 : i32
    %c0_i32_0 = arith.constant 0 : i32
    %c0_i32_1 = arith.constant 0 : i32
    return %c0_i32, %c0_i32_0 : i32, i32
  }
  func.func @transform_8(%arg0: i32, %arg1: i32) -> (i32, i32) {
    %c0_i32 = arith.constant 0 : i32
    %c0_i32_0 = arith.constant 0 : i32
    %c0_i32_1 = arith.constant 0 : i32
    return %c0_i32, %c0_i32_0 : i32, i32
  }
  func.func @transform_9(%arg0: i32, %arg1: i32) -> (i32, i32) {
    %c0_i32 = arith.constant 0 : i32
    %c0_i32_0 = arith.constant 0 : i32
    %c0_i32_1 = arith.constant 0 : i32
    return %c0_i32, %c0_i32_0 : i32, i32
  }
  func.func @transform_10(%arg0: i32, %arg1: i32) -> (i32, i32) {
    %c0_i32 = arith.constant 0 : i32
    %c0_i32_0 = arith.constant 0 : i32
    %c0_i32_1 = arith.constant 0 : i32
    return %c0_i32, %c0_i32_0 : i32, i32
  }
  func.func @transform_11(%arg0: i32, %arg1: i32) -> (i32, i32, i32) {
    %c0_i32 = arith.constant 0 : i32
    %c0_i32_0 = arith.constant 0 : i32
    return %arg0, %c0_i32, %arg1 : i32, i32, i32
  }
}

</mosaic_0001>

<llo_original>
// kernel: tpu_custom_call.1
$region0: #{tpu_custom_call.1}
  #allocation0 [shape = 'u32[]', space=smem, size = 0x4, offset = 0x4, fixed_abs, tag = 'smem constant byte address 0x4 - core index']
  #allocation1 [shape = 'u32[72,128]{1,0:T(1,128)}', space=vmem, size = 0x9000, scoped, tag = 'internal scratch']
  #allocation2 [shape = 'bf16[128,8]{1,0:T(8,128)(2,1)}', space=vmem, size = 0x8000, scoped, tag = 'scratch operand']
  #allocation3 [shape = 'bf16[8,128]{1,0:T(8,128)(2,1)}', space=vmem, size = 0x800, scoped, tag = 'scratch operand']
  %s0 = inlined_call_operand.vmem [shape: f32[2,16,512], index: 0, kind: input, shape index: {}]
  %s1 = inlined_call_operand.vmem [shape: bf16[2,16,128], index: 1, kind: input, shape index: {}]
  %s2 = inlined_call_operand.vmem [shape: bf16[2,128,16], index: 2, kind: input, shape index: {}]
  %s3 = inlined_call_operand.vmem [shape: bf16[8,16], index: 3, kind: input, shape index: {}]
  %s4 = inlined_call_operand.vmem [shape: f32[8,1], index: 4, kind: input, shape index: {}]
  %s5 = inlined_call_operand.vmem [shape: bf16[16,8], index: 5, kind: input, shape index: {}]
  %s6 = inlined_call_operand.vmem [shape: f32[1,8], index: 6, kind: input, shape index: {}]
  %s7 = inlined_call_operand.vmem [shape: bf16[8,16], index: 7, kind: input, shape index: {}]
  %s8 = inlined_call_operand.vmem [shape: f32[8,1], index: 8, kind: input, shape index: {}]
  %s9 = inlined_call_operand.vmem [shape: bf16[16,8], index: 9, kind: input, shape index: {}]
  %s10 = inlined_call_operand.vmem [shape: f32[16,1], index: 10, kind: input, shape index: {}]
  %s11 = inlined_call_operand.hbm [shape: f32[2,16,512], index: 11, kind: output, shape index: {}]
  %s12 = sld [smem:[#allocation0]]
  $region104: #{tpu_custom_call.1} parent=0
    _
  %s14 = ssub.s32 1, %s12
  %s15 = scalar_select 0, %s14, %s12
  $region1: #{tpu_custom_call.1} parent=0
    #allocation4 [shape = 'u8[32768]{0}', space=vmem, size = 0x8000, scoped, tag = 'input window, operand 0']
    #allocation5 [shape = 'u8[32768]{0}', space=vmem, size = 0x8000, scoped, tag = 'output window, operand 0']
    #allocation6 [shape = 's32[2]{0}', space=sflag, size = 0x8, scoped, tag = 'scoped memory for tpu_custom_call.1']
    %16 = vsyncpa [#allocation6], 0
    %s17 = scalar_lea.sflag [#allocation6], 1
    %18 = vsyncpa %s17, 0
    loop: start=0, step=1, limit=6
    $region2: #{tpu_custom_call.1} parent=1 // loop_pre_header
      _
    $region3: #{tpu_custom_call.1} parent=1 // loop_header
      %s20 = sphi 0, %s24
      %p21 = scmp.ge.s32.totalorder %s20, 6
      %s27 = sphi 0, %s39
      %s28 = sphi 0, %s35
      %s29 = sphi 0, %s27
      %s30 = sphi 0, %s28
      %s31 = sphi 0, %s29
      %s32 = sphi 0, %s30
      %s44 = sphi 0, %s46
      %s47 = sphi 0, %s44
      %s48 = sphi 0, %s47
      %s64 = sphi 0, %s48
      %s70 = sphi 0, %s72
      %s73 = sphi 0, %s70
      %s74 = sphi 0, %s73
      %s90 = sphi 0, %s74
      %s96 = sphi 0, %s98
      %s99 = sphi 0, %s96
      %s100 = sphi 0, %s99
      %s116 = sphi 0, %s100
      %s120 = sphi 0, %s120
      %s122 = sphi 0, %s120
      %s123 = sphi 0, %s122
      %s137 = sphi 0, %s123
      %s141 = sphi 0, %s141
      %s143 = sphi 0, %s141
      %s144 = sphi 0, %s143
      %s158 = sphi 0, %s144
      %s162 = sphi 0, %s162
      %s164 = sphi 0, %s162
      %s165 = sphi 0, %s164
      %s179 = sphi 0, %s165
      %s183 = sphi 0, %s183
      %s185 = sphi 0, %s183
      %s186 = sphi 0, %s185
      %s200 = sphi 0, %s186
      %s204 = sphi 0, %s204
      %s206 = sphi 0, %s204
      %s207 = sphi 0, %s206
      %s221 = sphi 0, %s207
      %s225 = sphi 0, %s225
      %s227 = sphi 0, %s225
      %s228 = sphi 0, %s227
      %s242 = sphi 0, %s228
      %s246 = sphi 0, %s246
      %s248 = sphi 0, %s246
      %s249 = sphi 0, %s248
      %s263 = sphi 0, %s249
      %s267 = sphi 0, %s267
      %s269 = sphi 0, %s267
      %s270 = sphi 0, %s269
      %s284 = sphi 0, %s270
      %s292 = sphi 0, %s294
      %s295 = sphi 0, %s292
      %s296 = sphi 0, %s295
      %s312 = sphi 0, %s296
    $region4: #{tpu_custom_call.1} parent=1 // loop_header_branch
      %23 = sbr.rel (%p21) target = $region8
    $region5: #{tpu_custom_call.1} parent=1 // loop_body
      %s25 = ssub.s32 %s20, 1
      %s26 = ssub.s32 %s20, 2
      %s33 = sadd.s32 1, %s28
      %p34 = scmp.ge.s32.totalorder %s33, 2
      %s35 = scalar_select %p34, 0, %s33
      %s36 = sadd.s32 1, %s27
      %s37 = scalar_select %p34, %s36, %s27
      %p38 = scmp.ge.s32.totalorder %s37, 2
      %s39 = scalar_select %p38, 0, %s37
      %s40 = ssub.s32 %s27, %s39
      %s41 = ssub.s32 %s28, %s35
      %s42 = sor.u32 %s40, %s41
      %p43 = scmp.eq.s32.totalorder %s42, 0
      %s45 = sadd.s32 %s44, 1
      %s46 = scalar_select %p43, %s44, %s45
      %p49 = pneg %p43
      %p50 = scmp.eq.s32.totalorder %s20, 3
      %p51 = por %p49, %p50
      %p52 = scmp.ne.s32.totalorder %s44, %s47
      %p53 = scmp.eq.s32.totalorder %s20, 0
      %p54 = por %p52, %p53
      %p55 = scmp.ne.s32.totalorder %s44, %s47
      %p56 = scmp.eq.s32.totalorder %s25, 3
      %p57 = por %p55, %p56
      %p58 = scmp.ne.s32.totalorder %s47, %s48
      %p59 = scmp.eq.s32.totalorder %s25, 0
      %p60 = por %p58, %p59
      %p61 = scmp.ne.s32.totalorder %s47, %s48
      %p62 = scmp.eq.s32.totalorder %s26, 3
      %p63 = por %p61, %p62
      %p65 = scmp.ne.s32.totalorder %s48, %s64
      %p66 = scmp.eq.s32.totalorder %s26, 0
      %p67 = por %p65, %p66
      %s68 = ssub.s32 %s27, %s39
      %p69 = scmp.eq.s32.totalorder %s68, 0
      %s71 = sadd.s32 %s70, 1
      %s72 = scalar_select %p69, %s70, %s71
      %p75 = pneg %p69
      %p76 = scmp.eq.s32.totalorder %s20, 3
      %p77 = por %p75, %p76
      %p78 = scmp.ne.s32.totalorder %s70, %s73
      %p79 = scmp.eq.s32.totalorder %s20, 0
      %p80 = por %p78, %p79
      %p81 = scmp.ne.s32.totalorder %s70, %s73
      %p82 = scmp.eq.s32.totalorder %s25, 3
      %p83 = por %p81, %p82
      %p84 = scmp.ne.s32.totalorder %s73, %s74
      %p85 = scmp.eq.s32.totalorder %s25, 0
      %p86 = por %p84, %p85
      %p87 = scmp.ne.s32.totalorder %s73, %s74
      %p88 = scmp.eq.s32.totalorder %s26, 3
      %p89 = por %p87, %p88
      %p91 = scmp.ne.s32.totalorder %s74, %s90
      %p92 = scmp.eq.s32.totalorder %s26, 0
      %p93 = por %p91, %p92
      %s94 = ssub.s32 %s27, %s39
      %p95 = scmp.eq.s32.totalorder %s94, 0
      %s97 = sadd.s32 %s96, 1
      %s98 = scalar_select %p95, %s96, %s97
      %p101 = pneg %p95
      %p102 = scmp.eq.s32.totalorder %s20, 3
      %p103 = por %p101, %p102
      %p104 = scmp.ne.s32.totalorder %s96, %s99
      %p105 = scmp.eq.s32.totalorder %s20, 0
      %p106 = por %p104, %p105
      %p107 = scmp.ne.s32.totalorder %s96, %s99
      %p108 = scmp.eq.s32.totalorder %s25, 3
      %p109 = por %p107, %p108
      %p110 = scmp.ne.s32.totalorder %s99, %s100
      %p111 = scmp.eq.s32.totalorder %s25, 0
      %p112 = por %p110, %p111
      %p113 = scmp.ne.s32.totalorder %s99, %s100
      %p114 = scmp.eq.s32.totalorder %s26, 3
      %p115 = por %p113, %p114
      %p117 = scmp.ne.s32.totalorder %s100, %s116
      %p118 = scmp.eq.s32.totalorder %s26, 0
      %p119 = por %p117, %p118
      %s121 = sadd.s32 %s120, 1
      %p124 = scmp.eq.s32.totalorder %s20, 3
      %p125 = scmp.ne.s32.totalorder %s120, %s122
      %p126 = scmp.eq.s32.totalorder %s20, 0
      %p127 = por %p125, %p126
      %p128 = scmp.ne.s32.totalorder %s120, %s122
      %p129 = scmp.eq.s32.totalorder %s25, 3
      %p130 = por %p128, %p129
      %p131 = scmp.ne.s32.totalorder %s122, %s123
      %p132 = scmp.eq.s32.totalorder %s25, 0
      %p133 = por %p131, %p132
      %p134 = scmp.ne.s32.totalorder %s122, %s123
      %p135 = scmp.eq.s32.totalorder %s26, 3
      %p136 = por %p134, %p135
      %p138 = scmp.ne.s32.totalorder %s123, %s137
      %p139 = scmp.eq.s32.totalorder %s26, 0
      %p140 = por %p138, %p139
      %s142 = sadd.s32 %s141, 1
      %p145 = scmp.eq.s32.totalorder %s20, 3
      %p146 = scmp.ne.s32.totalorder %s141, %s143
      %p147 = scmp.eq.s32.totalorder %s20, 0
      %p148 = por %p146, %p147
      %p149 = scmp.ne.s32.totalorder %s141, %s143
      %p150 = scmp.eq.s32.totalorder %s25, 3
      %p151 = por %p149, %p150
      %p152 = scmp.ne.s32.totalorder %s143, %s144
      %p153 = scmp.eq.s32.totalorder %s25, 0
      %p154 = por %p152, %p153
      %p155 = scmp.ne.s32.totalorder %s143, %s144
      %p156 = scmp.eq.s32.totalorder %s26, 3
      %p157 = por %p155, %p156
      %p159 = scmp.ne.s32.totalorder %s144, %s158
      %p160 = scmp.eq.s32.totalorder %s26, 0
      %p161 = por %p159, %p160
      %s163 = sadd.s32 %s162, 1
      %p166 = scmp.eq.s32.totalorder %s20, 3
      %p167 = scmp.ne.s32.totalorder %s162, %s164
      %p168 = scmp.eq.s32.totalorder %s20, 0
      %p169 = por %p167, %p168
      %p170 = scmp.ne.s32.totalorder %s162, %s164
      %p171 = scmp.eq.s32.totalorder %s25, 3
      %p172 = por %p170, %p171
      %p173 = scmp.ne.s32.totalorder %s164, %s165
      %p174 = scmp.eq.s32.totalorder %s25, 0
      %p175 = por %p173, %p174
      %p176 = scmp.ne.s32.totalorder %s164, %s165
      %p177 = scmp.eq.s32.totalorder %s26, 3
      %p178 = por %p176, %p177
      %p180 = scmp.ne.s32.totalorder %s165, %s179
      %p181 = scmp.eq.s32.totalorder %s26, 0
      %p182 = por %p180, %p181
      %s184 = sadd.s32 %s183, 1
      %p187 = scmp.eq.s32.totalorder %s20, 3
      %p188 = scmp.ne.s32.totalorder %s183, %s185
      %p189 = scmp.eq.s32.totalorder %s20, 0
      %p190 = por %p188, %p189
      %p191 = scmp.ne.s32.totalorder %s183, %s185
      %p192 = scmp.eq.s32.totalorder %s25, 3
      %p193 = por %p191, %p192
      %p194 = scmp.ne.s32.totalorder %s185, %s186
      %p195 = scmp.eq.s32.totalorder %s25, 0
      %p196 = por %p194, %p195
      %p197 = scmp.ne.s32.totalorder %s185, %s186
      %p198 = scmp.eq.s32.totalorder %s26, 3
      %p199 = por %p197, %p198
      %p201 = scmp.ne.s32.totalorder %s186, %s200
      %p202 = scmp.eq.s32.totalorder %s26, 0
      %p203 = por %p201, %p202
      %s205 = sadd.s32 %s204, 1
      %p208 = scmp.eq.s32.totalorder %s20, 3
      %p209 = scmp.ne.s32.totalorder %s204, %s206
      %p210 = scmp.eq.s32.totalorder %s20, 0
      %p211 = por %p209, %p210
      %p212 = scmp.ne.s32.totalorder %s204, %s206
      %p213 = scmp.eq.s32.totalorder %s25, 3
      %p214 = por %p212, %p213
      %p215 = scmp.ne.s32.totalorder %s206, %s207
      %p216 = scmp.eq.s32.totalorder %s25, 0
      %p217 = por %p215, %p216
      %p218 = scmp.ne.s32.totalorder %s206, %s207
      %p219 = scmp.eq.s32.totalorder %s26, 3
      %p220 = por %p218, %p219
      %p222 = scmp.ne.s32.totalorder %s207, %s221
      %p223 = scmp.eq.s32.totalorder %s26, 0
      %p224 = por %p222, %p223
      %s226 = sadd.s32 %s225, 1
      %p229 = scmp.eq.s32.totalorder %s20, 3
      %p230 = scmp.ne.s32.totalorder %s225, %s227
      %p231 = scmp.eq.s32.totalorder %s20, 0
      %p232 = por %p230, %p231
      %p233 = scmp.ne.s32.totalorder %s225, %s227
      %p234 = scmp.eq.s32.totalorder %s25, 3
      %p235 = por %p233, %p234
      %p236 = scmp.ne.s32.totalorder %s227, %s228
      %p237 = scmp.eq.s32.totalorder %s25, 0
      %p238 = por %p236, %p237
      %p239 = scmp.ne.s32.totalorder %s227, %s228
      %p240 = scmp.eq.s32.totalorder %s26, 3
      %p241 = por %p239, %p240
      %p243 = scmp.ne.s32.totalorder %s228, %s242
      %p244 = scmp.eq.s32.totalorder %s26, 0
      %p245 = por %p243, %p244
      %s247 = sadd.s32 %s246, 1
      %p250 = scmp.eq.s32.totalorder %s20, 3
      %p251 = scmp.ne.s32.totalorder %s246, %s248
      %p252 = scmp.eq.s32.totalorder %s20, 0
      %p253 = por %p251, %p252
      %p254 = scmp.ne.s32.totalorder %s246, %s248
      %p255 = scmp.eq.s32.totalorder %s25, 3
      %p256 = por %p254, %p255
      %p257 = scmp.ne.s32.totalorder %s248, %s249
      %p258 = scmp.eq.s32.totalorder %s25, 0
      %p259 = por %p257, %p258
      %p260 = scmp.ne.s32.totalorder %s248, %s249
      %p261 = scmp.eq.s32.totalorder %s26, 3
      %p262 = por %p260, %p261
      %p264 = scmp.ne.s32.totalorder %s249, %s263
      %p265 = scmp.eq.s32.totalorder %s26, 0
      %p266 = por %p264, %p265
      %s268 = sadd.s32 %s267, 1
      %p271 = scmp.eq.s32.totalorder %s20, 3
      %p272 = scmp.ne.s32.totalorder %s267, %s269
      %p273 = scmp.eq.s32.totalorder %s20, 0
      %p274 = por %p272, %p273
      %p275 = scmp.ne.s32.totalorder %s267, %s269
      %p276 = scmp.eq.s32.totalorder %s25, 3
      %p277 = por %p275, %p276
      %p278 = scmp.ne.s32.totalorder %s269, %s270
      %p279 = scmp.eq.s32.totalorder %s25, 0
      %p280 = por %p278, %p279
      %p281 = scmp.ne.s32.totalorder %s269, %s270
      %p282 = scmp.eq.s32.totalorder %s26, 3
      %p283 = por %p281, %p282
      %p285 = scmp.ne.s32.totalorder %s270, %s284
      %p286 = scmp.eq.s32.totalorder %s26, 0
      %p287 = por %p285, %p286
      %s288 = ssub.s32 %s27, %s39
      %s289 = ssub.s32 %s28, %s35
      %s290 = sor.u32 %s288, %s289
      %p291 = scmp.eq.s32.totalorder %s290, 0
      %s293 = sadd.s32 %s292, 1
      %s294 = scalar_select %p291, %s292, %s293
      %p297 = pneg %p291
      %p298 = scmp.eq.s32.totalorder %s20, 3
      %p299 = por %p297, %p298
      %p300 = scmp.ne.s32.totalorder %s292, %s295
      %p301 = scmp.eq.s32.totalorder %s20, 0
      %p302 = por %p300, %p301
      %p303 = scmp.ne.s32.totalorder %s292, %s295
      %p304 = scmp.eq.s32.totalorder %s25, 3
      %p305 = por %p303, %p304
      %p306 = scmp.ne.s32.totalorder %s295, %s296
      %p307 = scmp.eq.s32.totalorder %s25, 0
      %p308 = por %p306, %p307
      %p309 = scmp.ne.s32.totalorder %s295, %s296
      %p310 = scmp.eq.s32.totalorder %s26, 3
      %p311 = por %p309, %p310
      %p313 = scmp.ne.s32.totalorder %s296, %s312
      %p314 = scmp.eq.s32.totalorder %s26, 0
      %p315 = por %p313, %p314
      %p316 = scmp.le.s32.totalorder 1, %s20
      %p317 = scmp.lt.s32.totalorder %s20, 5
      %p318 = pnand %p316, %p317
      %p319 = pneg %p318
      // Predicated region
      $region9: #{tpu_custom_call.1} parent=5 // pred_check
        _
      $region10: #{tpu_custom_call.1} parent=5 // pred_check_branch
        %321 = sbr.rel (%p318) target = $region12
      $region11: #{tpu_custom_call.1} parent=5 // pred_region
        %s322 = ssub.s32 %s20, 1
        // Predicated region
        $region13: #{tpu_custom_call.1} parent=11 // pred_check
          %p323 = pneg %p133
        $region14: #{tpu_custom_call.1} parent=11 // pred_check_branch
          %325 = sbr.rel (%p323) target = $region16
        $region15: #{tpu_custom_call.1} parent=11 // pred_region
          _
        $region16: #{tpu_custom_call.1} parent=11 // pred_fallthru
          _
        // Predicated region
        $region17: #{tpu_custom_call.1} parent=11 // pred_check
          %p326 = pneg %p154
        $region18: #{tpu_custom_call.1} parent=11 // pred_check_branch
          %328 = sbr.rel (%p326) target = $region20
        $region19: #{tpu_custom_call.1} parent=11 // pred_region
          _
        $region20: #{tpu_custom_call.1} parent=11 // pred_fallthru
          _
        // Predicated region
        $region21: #{tpu_custom_call.1} parent=11 // pred_check
          %p329 = pneg %p175
        $region22: #{tpu_custom_call.1} parent=11 // pred_check_branch
          %331 = sbr.rel (%p329) target = $region24
        $region23: #{tpu_custom_call.1} parent=11 // pred_region
          _
        $region24: #{tpu_custom_call.1} parent=11 // pred_fallthru
          _
        // Predicated region
        $region25: #{tpu_custom_call.1} parent=11 // pred_check
          %p332 = pneg %p196
        $region26: #{tpu_custom_call.1} parent=11 // pred_check_branch
          %334 = sbr.rel (%p332) target = $region28
        $region27: #{tpu_custom_call.1} parent=11 // pred_region
          _
        $region28: #{tpu_custom_call.1} parent=11 // pred_fallthru
          _
        // Predicated region
        $region29: #{tpu_custom_call.1} parent=11 // pred_check
          %p335 = pneg %p217
        $region30: #{tpu_custom_call.1} parent=11 // pred_check_branch
          %337 = sbr.rel (%p335) target = $region32
        $region31: #{tpu_custom_call.1} parent=11 // pred_region
          _
        $region32: #{tpu_custom_call.1} parent=11 // pred_fallthru
          _
        // Predicated region
        $region33: #{tpu_custom_call.1} parent=11 // pred_check
          %p338 = pneg %p238
        $region34: #{tpu_custom_call.1} parent=11 // pred_check_branch
          %340 = sbr.rel (%p338) target = $region36
        $region35: #{tpu_custom_call.1} parent=11 // pred_region
          _
        $region36: #{tpu_custom_call.1} parent=11 // pred_fallthru
          _
        // Predicated region
        $region37: #{tpu_custom_call.1} parent=11 // pred_check
          %p341 = pneg %p259
        $region38: #{tpu_custom_call.1} parent=11 // pred_check_branch
          %343 = sbr.rel (%p341) target = $region40
        $region39: #{tpu_custom_call.1} parent=11 // pred_region
          _
        $region40: #{tpu_custom_call.1} parent=11 // pred_fallthru
          _
        // Predicated region
        $region41: #{tpu_custom_call.1} parent=11 // pred_check
          %p344 = pneg %p280
        $region42: #{tpu_custom_call.1} parent=11 // pred_check_branch
          %346 = sbr.rel (%p344) target = $region44
        $region43: #{tpu_custom_call.1} parent=11 // pred_region
          _
        $region44: #{tpu_custom_call.1} parent=11 // pred_fallthru
          _
      $region12: #{tpu_custom_call.1} parent=5 // pred_fallthru
        _
      %p347 = scmp.lt.s32.totalorder %s20, 4
      // Predicated region
      $region45: #{tpu_custom_call.1} parent=5 // pred_check
        %p348 = pneg %p347
      $region46: #{tpu_custom_call.1} parent=5 // pred_check_branch
        %350 = sbr.rel (%p348) target = $region48
      $region47: #{tpu_custom_call.1} parent=5 // pred_region
        // Predicated region
        $region49: #{tpu_custom_call.1} parent=47 // pred_check
          %p351 = pneg %p54
        $region50: #{tpu_custom_call.1} parent=47 // pred_check_branch
          %353 = sbr.rel (%p351) target = $region52
        $region51: #{tpu_custom_call.1} parent=47 // pred_region
          %s354 = sand.u32 %s44, 1
          %s355 = sand.u32 %s44, 1
          %s356 = smul.addr %s355, 32
          %s357 = scalar_lea.vmem [#allocation4], %s356
          %s358 = smul.u32 2, %s28
          %s359 = smul.addr %s27, 8
          %s360 = sadd.s32 %s358, %s359
          %s361 = smul.addr %s360, 8
          %s362 = scalar_lea.vmem %s0, %s361
          // Predicated region
          $region53: #{tpu_custom_call.1} parent=51 // pred_check
            _
          $region54: #{tpu_custom_call.1} parent=51 // pred_check_branch
            %364 = sbr.rel (0) target = $region56
          $region55: #{tpu_custom_call.1} parent=51 // pred_region
            // Predicated region
            $region57: #{tpu_custom_call.1} parent=55 // pred_check
              _
            $region58: #{tpu_custom_call.1} parent=55 // pred_check_branch
              %366 = sbr.rel (0) target = $region60
            $region59: #{tpu_custom_call.1} parent=55 // pred_region
              loop: start=0, step=1, limit=1
              $region61: #{tpu_custom_call.1} parent=59 // loop_pre_header
                _
              $region62: #{tpu_custom_call.1} parent=59 // loop_header
                %s368 = sphi 0, %s372
                %p369 = scmp.ge.s32.totalorder %s368, 1
                %s373 = sphi %s362, %s362
                %s374 = sphi %s357, %s357
              $region63: #{tpu_custom_call.1} parent=59 // loop_header_branch
                %371 = sbr.rel (%p369) target = $region67
              $region64: #{tpu_custom_call.1} parent=59 // loop_body
                %v375 = vld [vmem:[%s373] sm:$0xff]
                %376 = vst [vmem:[%s374] sm:$0xff] %v375
                %v377 = vld [vmem:[%s373 + $0x8] sm:$0xff]
                %378 = vst [vmem:[%s374 + $0x8] sm:$0xff] %v377
                %v379 = vld [vmem:[%s373 + $0x20] sm:$0xff]
                %380 = vst [vmem:[%s374 + $0x10] sm:$0xff] %v379
                %v381 = vld [vmem:[%s373 + $0x28] sm:$0xff]
                %382 = vst [vmem:[%s374 + $0x18] sm:$0xff] %v381
              $region65: #{tpu_custom_call.1} parent=59 // loop_footer
                %s372 = sadd.s32 1, %s368
              $region66: #{tpu_custom_call.1} parent=59 // loop_footer_branch
                %367 = sbr.rel target = $region62
              $region67: #{tpu_custom_call.1} parent=59 // loop_exit
                _
            $region60: #{tpu_custom_call.1} parent=55 // pred_fallthru
              _
            // Predicated region
            $region68: #{tpu_custom_call.1} parent=55 // pred_check
              _
            $region69: #{tpu_custom_call.1} parent=55 // pred_check_branch
              %384 = sbr.rel target = $region71
            $region70: #{tpu_custom_call.1} parent=55 // pred_region
              _
            $region71: #{tpu_custom_call.1} parent=55 // pred_fallthru
              _
          $region56: #{tpu_custom_call.1} parent=51 // pred_fallthru
            _
          %385 = vnop
        $region52: #{tpu_custom_call.1} parent=47 // pred_fallthru
          _
        // Predicated region
        $region72: #{tpu_custom_call.1} parent=47 // pred_check
          %p386 = pneg %p80
        $region73: #{tpu_custom_call.1} parent=47 // pred_check_branch
          %388 = sbr.rel (%p386) target = $region75
        $region74: #{tpu_custom_call.1} parent=47 // pred_region
          %p389 = scmp.lt.s32.totalorder %s27, 1
          %s390 = scalar_select %p389, %s27, 1
          %s391 = smul.addr %s390, 2
          %s392 = smul.addr %s391, 4
          %s393 = scalar_lea.vmem %s1, %s392
        $region75: #{tpu_custom_call.1} parent=47 // pred_fallthru
          _
        // Predicated region
        $region76: #{tpu_custom_call.1} parent=47 // pred_check
          %p394 = pneg %p106
        $region77: #{tpu_custom_call.1} parent=47 // pred_check_branch
          %396 = sbr.rel (%p394) target = $region79
        $region78: #{tpu_custom_call.1} parent=47 // pred_region
          %p397 = scmp.lt.s32.totalorder %s27, 1
          %s398 = scalar_select %p397, %s27, 1
          %s399 = smul.addr %s398, 16
          %s400 = smul.addr %s399, 4
          %s401 = scalar_lea.vmem %s2, %s400
        $region79: #{tpu_custom_call.1} parent=47 // pred_fallthru
          _
      $region48: #{tpu_custom_call.1} parent=5 // pred_fallthru
        _
      %p402 = scmp.le.s32.totalorder 1, %s20
      %p403 = scmp.lt.s32.totalorder %s20, 5
      %p404 = pnand %p402, %p403
      %p405 = pneg %p404
      // Predicated region
      $region80: #{tpu_custom_call.1} parent=5 // pred_check
        _
      $region81: #{tpu_custom_call.1} parent=5 // pred_check_branch
        %407 = sbr.rel (%p404) target = $region83
      $region82: #{tpu_custom_call.1} parent=5 // pred_region
        %s408 = ssub.s32 %s20, 1
        %s409 = sand.u32 %s47, 1
        %s410 = sand.u32 %s47, 1
        %s411 = smul.addr %s410, 32
        %s412 = scalar_lea.vmem [#allocation4], %s411
        // Predicated region
        $region84: #{tpu_custom_call.1} parent=82 // pred_check
          %p413 = pneg %p60
        $region85: #{tpu_custom_call.1} parent=82 // pred_check_branch
          %415 = sbr.rel (%p413) target = $region87
        $region86: #{tpu_custom_call.1} parent=82 // pred_region
          _
        $region87: #{tpu_custom_call.1} parent=82 // pred_fallthru
          _
        %s416 = sand.u32 %s47, 1
        %s417 = sand.u32 %s47, 1
        %s418 = smul.addr %s417, 32
        %s419 = scalar_lea.vmem [#allocation4], %s418
        %p420 = pneg %p60
        %p421 = pneg %p57
        %p422 = scmp.lt.s32.totalorder %s29, 1
        %s423 = scalar_select %p422, %s29, 1
        %s424 = smul.addr %s423, 2
        %s425 = smul.addr %s424, 4
        %s426 = scalar_lea.vmem %s1, %s425
        %p427 = pneg %p86
        %p428 = pneg %p83
        %p429 = scmp.lt.s32.totalorder %s29, 1
        %s430 = scalar_select %p429, %s29, 1
        %s431 = smul.addr %s430, 16
        %s432 = smul.addr %s431, 4
        %s433 = scalar_lea.vmem %s2, %s432
        %p434 = pneg %p112
        %p435 = pneg %p109
        %p436 = pneg %p133
        %p437 = pneg %p130
        %p438 = pneg %p154
        %p439 = pneg %p151
        %p440 = pneg %p175
        %p441 = pneg %p172
        %p442 = pneg %p196
        %p443 = pneg %p193
        %p444 = pneg %p217
        %p445 = pneg %p214
        %p446 = pneg %p238
        %p447 = pneg %p235
        %p448 = pneg %p259
        %p449 = pneg %p256
        %p450 = pneg %p280
        %p451 = pneg %p277
        %p452 = pneg %p308
        %p453 = pneg %p305
        %s454 = sand.u32 %s295, 1
        %s455 = scalar_lea.sflag [#allocation6], %s454
        %s456 = sand.u32 %s295, 1
        %s457 = smul.addr %s456, 32
        %s458 = scalar_lea.vmem [#allocation5], %s457
        %s459 = smul.u32 2, %s30
        %p460 = scmp.lt.s32.totalorder %s29, 1
        %s461 = scalar_select %p460, %s29, 1
        %s462 = smul.addr %s461, 2
        %s463 = smul.addr %s462, 4
        %s464 = scalar_lea.vmem %s1, %s463
        %p465 = scmp.lt.s32.totalorder %s29, 1
        %s466 = scalar_select %p465, %s29, 1
        %s467 = smul.addr %s466, 16
        %s468 = smul.addr %s467, 4
        %s469 = scalar_lea.vmem %s2, %s468
        %s470 = smul.u32 2, %s30
        %p472 = scmp.eq.s32.totalorder %s30, 0
        // Predicated region
        $region88: #{tpu_custom_call.1} parent=82 // pred_check
          %p473 = pneg %p472
        $region89: #{tpu_custom_call.1} parent=82 // pred_check_branch
          %475 = sbr.rel (%p473) target = $region91
        $region90: #{tpu_custom_call.1} parent=82 // pred_region
          %v476 = vld [vmem:[%s469] sm:$0xf]
          %v477 = vld [vmem:[%s469 + $0x4] sm:$0xf]
          %v478 = vld [vmem:[%s469 + $0x8] sm:$0xf]
          %v479 = vld [vmem:[%s469 + $0xc] sm:$0xf]
          %v480 = vld [vmem:[%s469 + $0x10] sm:$0xf]
          %v481 = vld [vmem:[%s469 + $0x14] sm:$0xf]
          %v482 = vld [vmem:[%s469 + $0x18] sm:$0xf]
          %v483 = vld [vmem:[%s469 + $0x1c] sm:$0xf]
          %v484 = vld [vmem:[%s469 + $0x20] sm:$0xf]
          %v485 = vld [vmem:[%s469 + $0x24] sm:$0xf]
          %v486 = vld [vmem:[%s469 + $0x28] sm:$0xf]
          %v487 = vld [vmem:[%s469 + $0x2c] sm:$0xf]
          %v488 = vld [vmem:[%s469 + $0x30] sm:$0xf]
          %v489 = vld [vmem:[%s469 + $0x34] sm:$0xf]
          %v490 = vld [vmem:[%s469 + $0x38] sm:$0xf]
          %v491 = vld [vmem:[%s469 + $0x3c] sm:$0xf]
          %v492 = vld [vmem:[%s5] sm:$0xf]
          %v493 = vld [vmem:[%s5 + $0x4] sm:$0xf]
          %v494 = vld [vmem:[%s6] sm:$0x1]
          %v496 = vperm.slane %v494, 0
          %v514 = vunpack.c.l.b16 %v476
          %v515 = vunpack.c.l.b16 %v477
          %v516 = vunpack.c.l.b16 %v478
          %v517 = vunpack.c.l.b16 %v479
          %v518 = vunpack.c.l.b16 %v480
          %v519 = vunpack.c.l.b16 %v481
          %v520 = vunpack.c.l.b16 %v482
          %v521 = vunpack.c.l.b16 %v483
          %v522 = vunpack.c.l.b16 %v484
          %v523 = vunpack.c.l.b16 %v485
          %v524 = vunpack.c.l.b16 %v486
          %v525 = vunpack.c.l.b16 %v487
          %v526 = vunpack.c.l.b16 %v488
          %v527 = vunpack.c.l.b16 %v489
          %v528 = vunpack.c.l.b16 %v490
          %v529 = vunpack.c.l.b16 %v491
          %v530 = vpack.c.b16 %v515, %v514
          %v531 = vpack.c.b16 %v517, %v516
          %v532 = vpack.c.b16 %v519, %v518
          %v533 = vpack.c.b16 %v521, %v520
          %v534 = vpack.c.b16 %v523, %v522
          %v535 = vpack.c.b16 %v525, %v524
          %v536 = vpack.c.b16 %v527, %v526
          %v537 = vpack.c.b16 %v529, %v528
          %v540 = vunpack.c.l.b16 %v492
          %v541 = vunpack.c.l.b16 %v493
          %v542 = vpack.c.b16 %v541, %v540
          %vm544 = vcmask 130048
          %v546 = vsel %vm544, %v530, 0
          %v549 = vsel %vm544, %v531, 0
          %v552 = vsel %vm544, %v532, 0
          %v555 = vsel %vm544, %v533, 0
          %v558 = vsel %vm544, %v534, 0
          %v561 = vsel %vm544, %v535, 0
          %v564 = vsel %vm544, %v536, 0
          %v567 = vsel %vm544, %v537, 0
          %569 = vmatpush.bf16.msra.mxu0 0
          %570 = vmatpush.bf16.msra.mxu0 0
          %571 = vmatpush.bf16.msra.mxu0 0
          %572 = vmatpush.bf16.msra.mxu0 0
          %573 = vmatpush.bf16.msra.mxu0 0
          %574 = vmatpush.bf16.msra.mxu0 0
          %575 = vmatpush.bf16.msra.mxu0 0
          %576 = vmatpush.bf16.msra.mxu0 %v542
          %577 = vmatmul.bf16.gmra.mxu0 %v546
          %v578 = vpop.f32.mrf.mxu0
          %v579 = vadd.f32 %v496, %v578
          %v580 = vpop.f32.mrf.mxu0
          %v581 = vadd.f32 %v496, %v580
          %582 = vmatmul.bf16.gmra.mxu0 %v549
          %v583 = vpop.f32.mrf.mxu0
          %v584 = vadd.f32 %v496, %v583
          %v585 = vpop.f32.mrf.mxu0
          %v586 = vadd.f32 %v496, %v585
          %587 = vmatmul.bf16.gmra.mxu0 %v552
          %v588 = vpop.f32.mrf.mxu0
          %v589 = vadd.f32 %v496, %v588
          %v590 = vpop.f32.mrf.mxu0
          %v591 = vadd.f32 %v496, %v590
          %592 = vmatmul.bf16.gmra.mxu0 %v555
          %v593 = vpop.f32.mrf.mxu0
          %v594 = vadd.f32 %v496, %v593
          %v595 = vpop.f32.mrf.mxu0
          %v596 = vadd.f32 %v496, %v595
          %597 = vmatmul.bf16.gmra.mxu0 %v558
          %v598 = vpop.f32.mrf.mxu0
          %v599 = vadd.f32 %v496, %v598
          %v600 = vpop.f32.mrf.mxu0
          %v601 = vadd.f32 %v496, %v600
          %602 = vmatmul.bf16.gmra.mxu0 %v561
          %v603 = vpop.f32.mrf.mxu0
          %v604 = vadd.f32 %v496, %v603
          %v605 = vpop.f32.mrf.mxu0
          %v606 = vadd.f32 %v496, %v605
          %607 = vmatmul.bf16.gmra.mxu0 %v564
          %v608 = vpop.f32.mrf.mxu0
          %v609 = vadd.f32 %v496, %v608
          %v610 = vpop.f32.mrf.mxu0
          %v611 = vadd.f32 %v496, %v610
          %612 = vmatmul.bf16.gmra.mxu0 %v567
          %v613 = vpop.f32.mrf.mxu0
          %v614 = vadd.f32 %v496, %v613
          %v615 = vpop.f32.mrf.mxu0
          %v616 = vadd.f32 %v496, %v615
          %617 = vdwg.mxu0
          %v618 = vld [vmem:[%s7] sm:$0xf]
          %v619 = vld [vmem:[%s464] sm:$0xf]
          %v620 = vld [vmem:[%s464 + $0x4] sm:$0xf]
          %v621 = vld [vmem:[%s8] sm:$0xff]
          %623 = vset.pattern.permute.xlu0 0
          %624 = vperm.xlu0 %623, %v621
          %v625 = vpop.permute.xlu0 %624
          %v629 = vunpack.c.l.b16 %v619
          %v630 = vunpack.c.l.b16 %v620
          %v631 = vpack.c.b16 %v630, %v629
          %v634 = vsel %vm544, %v618, 0
          %636 = vmatpush.bf16.msra.mxu0 0
          %637 = vmatpush.bf16.msra.mxu0 0
          %638 = vmatpush.bf16.msra.mxu0 0
          %639 = vmatpush.bf16.msra.mxu0 0
          %640 = vmatpush.bf16.msra.mxu0 0
          %641 = vmatpush.bf16.msra.mxu0 0
          %642 = vmatpush.bf16.msra.mxu0 0
          %643 = vmatpush.bf16.msra.mxu0 %v631
          %644 = vmatmul.bf16.gmra.mxu0 %v634
          %v645 = vpop.f32.mrf.mxu0
          %v646 = vadd.f32 %v625, %v645
          %v647 = vpop.f32.mrf.mxu0
          %648 = vdwg.mxu0
          %v649 = vpack.c.bf16 %v579, %v579
          %v650 = vpack.c.bf16 %v581, %v581
          %v651 = vpack.c.bf16 %v584, %v584
          %v652 = vpack.c.bf16 %v586, %v586
          %v653 = vpack.c.bf16 %v589, %v589
          %v654 = vpack.c.bf16 %v591, %v591
          %v655 = vpack.c.bf16 %v594, %v594
          %v656 = vpack.c.bf16 %v596, %v596
          %v657 = vpack.c.bf16 %v599, %v599
          %v658 = vpack.c.bf16 %v601, %v601
          %v659 = vpack.c.bf16 %v604, %v604
          %v660 = vpack.c.bf16 %v606, %v606
          %v661 = vpack.c.bf16 %v609, %v609
          %v662 = vpack.c.bf16 %v611, %v611
          %v663 = vpack.c.bf16 %v614, %v614
          %v664 = vpack.c.bf16 %v616, %v616
          %vm665 = vcmask 60416
          %666 = vst.msk [vmem:[#allocation2] sm:$0xf] %vm665, %v649
          %667 = vst.msk [vmem:[#allocation2 + $0x4] sm:$0xf] %vm665, %v650
          %668 = vst.msk [vmem:[#allocation2 + $0x8] sm:$0xf] %vm665, %v651
          %669 = vst.msk [vmem:[#allocation2 + $0xc] sm:$0xf] %vm665, %v652
          %670 = vst.msk [vmem:[#allocation2 + $0x10] sm:$0xf] %vm665, %v653
          %671 = vst.msk [vmem:[#allocation2 + $0x14] sm:$0xf] %vm665, %v654
          %672 = vst.msk [vmem:[#allocation2 + $0x18] sm:$0xf] %vm665, %v655
          %673 = vst.msk [vmem:[#allocation2 + $0x1c] sm:$0xf] %vm665, %v656
          %674 = vst.msk [vmem:[#allocation2 + $0x20] sm:$0xf] %vm665, %v657
          %675 = vst.msk [vmem:[#allocation2 + $0x24] sm:$0xf] %vm665, %v658
          %676 = vst.msk [vmem:[#allocation2 + $0x28] sm:$0xf] %vm665, %v659
          %677 = vst.msk [vmem:[#allocation2 + $0x2c] sm:$0xf] %vm665, %v660
          %678 = vst.msk [vmem:[#allocation2 + $0x30] sm:$0xf] %vm665, %v661
          %679 = vst.msk [vmem:[#allocation2 + $0x34] sm:$0xf] %vm665, %v662
          %680 = vst.msk [vmem:[#allocation2 + $0x38] sm:$0xf] %vm665, %v663
          %681 = vst.msk [vmem:[#allocation2 + $0x3c] sm:$0xf] %vm665, %v664
          %v682 = vpack.c.bf16 %v646, %v646
          %683 = vst [vmem:[#allocation3] sm:$0xf] %v682
        $region91: #{tpu_custom_call.1} parent=82 // pred_fallthru
          _
        %v684 = vld [vmem:[%s412] sm:$0xff]
        %v685 = vld [vmem:[%s412 + $0x8] sm:$0xff]
        %v686 = vld [vmem:[%s412 + $0x10] sm:$0xff]
        %v687 = vld [vmem:[%s412 + $0x18] sm:$0xff]
        %v688 = vld [vmem:[%s3] sm:$0xf]
        %v689 = vpack.c.bf16 %v686, %v684
        %v690 = vpack.c.bf16 %v687, %v685
        %v691 = vld [vmem:[%s4] sm:$0xff]
        %693 = vset.pattern.permute.xlu0 0
        %694 = vperm.xlu0 %693, %v691
        %v695 = vpop.permute.xlu0 %694
        %vm697 = vcmask 130048
        %v699 = vsel %vm697, %v688, 0
        %701 = vmatpush.bf16.msra.mxu0 0
        %702 = vmatpush.bf16.msra.mxu0 0
        %703 = vmatpush.bf16.msra.mxu0 0
        %704 = vmatpush.bf16.msra.mxu0 0
        %705 = vmatpush.bf16.msra.mxu0 0
        %706 = vmatpush.bf16.msra.mxu0 0
        %707 = vmatpush.bf16.msra.mxu0 0
        %708 = vmatpush.bf16.msra.mxu0 %v689
        %709 = vmatmul.bf16.gmra.mxu0 %v699
        %v710 = vpop.f32.mrf.mxu0
        %v711 = vadd.f32 %v695, %v710
        %v712 = vpop.f32.mrf.mxu0
        %713 = vdwg.mxu0
        %714 = vmatpush.bf16.msra.mxu0 0
        %715 = vmatpush.bf16.msra.mxu0 0
        %716 = vmatpush.bf16.msra.mxu0 0
        %717 = vmatpush.bf16.msra.mxu0 0
        %718 = vmatpush.bf16.msra.mxu0 0
        %719 = vmatpush.bf16.msra.mxu0 0
        %720 = vmatpush.bf16.msra.mxu0 0
        %721 = vmatpush.bf16.msra.mxu0 %v690
        %722 = vmatmul.bf16.gmra.mxu0 %v699
        %v723 = vpop.f32.mrf.mxu0
        %v724 = vadd.f32 %v695, %v723
        %v725 = vpop.f32.mrf.mxu0
        %726 = vdwg.mxu0
        %v727 = vld [vmem:[#allocation2] sm:$0xf]
        %v728 = vld [vmem:[#allocation2 + $0x4] sm:$0xf]
        %v729 = vld [vmem:[#allocation2 + $0x8] sm:$0xf]
        %v730 = vld [vmem:[#allocation2 + $0xc] sm:$0xf]
        %v731 = vld [vmem:[#allocation2 + $0x10] sm:$0xf]
        %v732 = vld [vmem:[#allocation2 + $0x14] sm:$0xf]
        %v733 = vld [vmem:[#allocation2 + $0x18] sm:$0xf]
        %v734 = vld [vmem:[#allocation2 + $0x1c] sm:$0xf]
        %v735 = vld [vmem:[#allocation2 + $0x20] sm:$0xf]
        %v736 = vld [vmem:[#allocation2 + $0x24] sm:$0xf]
        %v737 = vld [vmem:[#allocation2 + $0x28] sm:$0xf]
        %v738 = vld [vmem:[#allocation2 + $0x2c] sm:$0xf]
        %v739 = vld [vmem:[#allocation2 + $0x30] sm:$0xf]
        %v740 = vld [vmem:[#allocation2 + $0x34] sm:$0xf]
        %v741 = vld [vmem:[#allocation2 + $0x38] sm:$0xf]
        %v742 = vld [vmem:[#allocation2 + $0x3c] sm:$0xf]
        %v743 = vpack.c.bf16 %v711, %v711
        %v744 = vpack.c.bf16 %v724, %v724
        %v761 = vunpack.c.l.b16 %v727
        %v762 = vunpack.c.l.b16 %v728
        %v763 = vunpack.c.l.b16 %v729
        %v764 = vunpack.c.l.b16 %v730
        %v765 = vunpack.c.l.b16 %v731
        %v766 = vunpack.c.l.b16 %v732
        %v767 = vunpack.c.l.b16 %v733
        %v768 = vunpack.c.l.b16 %v734
        %v769 = vunpack.c.l.b16 %v735
        %v770 = vunpack.c.l.b16 %v736
        %v771 = vunpack.c.l.b16 %v737
        %v772 = vunpack.c.l.b16 %v738
        %v773 = vunpack.c.l.b16 %v739
        %v774 = vunpack.c.l.b16 %v740
        %v775 = vunpack.c.l.b16 %v741
        %v776 = vunpack.c.l.b16 %v742
        %v777 = vpack.c.b16 %v762, %v761
        %v778 = vpack.c.b16 %v764, %v763
        %v779 = vpack.c.b16 %v766, %v765
        %v780 = vpack.c.b16 %v768, %v767
        %v781 = vpack.c.b16 %v770, %v769
        %v782 = vpack.c.b16 %v772, %v771
        %v783 = vpack.c.b16 %v774, %v773
        %v784 = vpack.c.b16 %v776, %v775
        %vm785 = vcmask 64512
        %v787 = vsel %vm785, %v777, 0
        %v790 = vsel %vm785, %v778, 0
        %v793 = vsel %vm785, %v779, 0
        %v796 = vsel %vm785, %v780, 0
        %v799 = vsel %vm785, %v781, 0
        %v802 = vsel %vm785, %v782, 0
        %v805 = vsel %vm785, %v783, 0
        %v808 = vsel %vm785, %v784, 0
        %vm810 = vcmask 1043456
        %v812 = vsel %vm810, %v743, 0
        %v815 = vsel %vm810, %v744, 0
        %817 = vmatpush.bf16.msra.mxu0 0
        %818 = vmatpush.bf16.msra.mxu0 0
        %819 = vmatpush.bf16.msra.mxu0 0
        %820 = vmatpush.bf16.msra.mxu0 0
        %821 = vmatpush.bf16.msra.mxu0 0
        %822 = vmatpush.bf16.msra.mxu0 0
        %823 = vmatpush.bf16.msra.mxu0 0
        %824 = vmatpush.bf16.msra.mxu0 %v812
        %825 = vmatmul.bf16.gmra.mxu0 %v787
        %v826 = vpop.f32.mrf.mxu0
        %v827 = vadd.f32 0.0, %v826
        %v828 = vpop.f32.mrf.mxu0
        %v829 = vadd.f32 0.0, %v828
        %830 = vmatmul.bf16.gmra.mxu0 %v790
        %v831 = vpop.f32.mrf.mxu0
        %v832 = vadd.f32 0.0, %v831
        %v833 = vpop.f32.mrf.mxu0
        %v834 = vadd.f32 0.0, %v833
        %835 = vmatmul.bf16.gmra.mxu0 %v793
        %v836 = vpop.f32.mrf.mxu0
        %v837 = vadd.f32 0.0, %v836
        %v838 = vpop.f32.mrf.mxu0
        %v839 = vadd.f32 0.0, %v838
        %840 = vmatmul.bf16.gmra.mxu0 %v796
        %v841 = vpop.f32.mrf.mxu0
        %v842 = vadd.f32 0.0, %v841
        %v843 = vpop.f32.mrf.mxu0
        %v844 = vadd.f32 0.0, %v843
        %845 = vmatmul.bf16.gmra.mxu0 %v799
        %v846 = vpop.f32.mrf.mxu0
        %v847 = vadd.f32 0.0, %v846
        %v848 = vpop.f32.mrf.mxu0
        %v849 = vadd.f32 0.0, %v848
        %850 = vmatmul.bf16.gmra.mxu0 %v802
        %v851 = vpop.f32.mrf.mxu0
        %v852 = vadd.f32 0.0, %v851
        %v853 = vpop.f32.mrf.mxu0
        %v854 = vadd.f32 0.0, %v853
        %855 = vmatmul.bf16.gmra.mxu0 %v805
        %v856 = vpop.f32.mrf.mxu0
        %v857 = vadd.f32 0.0, %v856
        %v858 = vpop.f32.mrf.mxu0
        %v859 = vadd.f32 0.0, %v858
        %860 = vmatmul.bf16.gmra.mxu0 %v808
        %v861 = vpop.f32.mrf.mxu0
        %v862 = vadd.f32 0.0, %v861
        %v863 = vpop.f32.mrf.mxu0
        %v864 = vadd.f32 0.0, %v863
        %865 = vdwg.mxu0
        %866 = vmatpush.bf16.msra.mxu0 0
        %867 = vmatpush.bf16.msra.mxu0 0
        %868 = vmatpush.bf16.msra.mxu0 0
        %869 = vmatpush.bf16.msra.mxu0 0
        %870 = vmatpush.bf16.msra.mxu0 0
        %871 = vmatpush.bf16.msra.mxu0 0
        %872 = vmatpush.bf16.msra.mxu0 0
        %873 = vmatpush.bf16.msra.mxu0 %v815
        %874 = vmatmul.bf16.gmra.mxu0 %v787
        %v875 = vpop.f32.mrf.mxu0
        %v876 = vadd.f32 0.0, %v875
        %v877 = vpop.f32.mrf.mxu0
        %v878 = vadd.f32 0.0, %v877
        %879 = vmatmul.bf16.gmra.mxu0 %v790
        %v880 = vpop.f32.mrf.mxu0
        %v881 = vadd.f32 0.0, %v880
        %v882 = vpop.f32.mrf.mxu0
        %v883 = vadd.f32 0.0, %v882
        %884 = vmatmul.bf16.gmra.mxu0 %v793
        %v885 = vpop.f32.mrf.mxu0
        %v886 = vadd.f32 0.0, %v885
        %v887 = vpop.f32.mrf.mxu0
        %v888 = vadd.f32 0.0, %v887
        %889 = vmatmul.bf16.gmra.mxu0 %v796
        %v890 = vpop.f32.mrf.mxu0
        %v891 = vadd.f32 0.0, %v890
        %v892 = vpop.f32.mrf.mxu0
        %v893 = vadd.f32 0.0, %v892
        %894 = vmatmul.bf16.gmra.mxu0 %v799
        %v895 = vpop.f32.mrf.mxu0
        %v896 = vadd.f32 0.0, %v895
        %v897 = vpop.f32.mrf.mxu0
        %v898 = vadd.f32 0.0, %v897
        %899 = vmatmul.bf16.gmra.mxu0 %v802
        %v900 = vpop.f32.mrf.mxu0
        %v901 = vadd.f32 0.0, %v900
        %v902 = vpop.f32.mrf.mxu0
        %v903 = vadd.f32 0.0, %v902
        %904 = vmatmul.bf16.gmra.mxu0 %v805
        %v905 = vpop.f32.mrf.mxu0
        %v906 = vadd.f32 0.0, %v905
        %v907 = vpop.f32.mrf.mxu0
        %v908 = vadd.f32 0.0, %v907
        %909 = vmatmul.bf16.gmra.mxu0 %v808
        %v910 = vpop.f32.mrf.mxu0
        %v911 = vadd.f32 0.0, %v910
        %v912 = vpop.f32.mrf.mxu0
        %v913 = vadd.f32 0.0, %v912
        %914 = vdwg.mxu0
        %v915 = vmax.f32 %v827, %v832
        %v916 = vmax.f32 %v829, %v834
        %v917 = vmax.f32 %v915, %v837
        %v918 = vmax.f32 %v916, %v839
        %v919 = vmax.f32 %v917, %v842
        %v920 = vmax.f32 %v918, %v844
        %v921 = vmax.f32 %v919, %v847
        %v922 = vmax.f32 %v920, %v849
        %v923 = vmax.f32 %v921, %v852
        %v924 = vmax.f32 %v922, %v854
        %v925 = vmax.f32 %v923, %v857
        %v926 = vmax.f32 %v924, %v859
        %v927 = vmax.f32 %v925, %v862
        %v928 = vmax.f32 %v926, %v864
        %v929 = vmax.f32 %v927, %v928
        %v930 = vrot.slane %v929, 4
        %v931 = vmax.f32 %v929, %v930
        %v932 = vrot.slane %v931, 2
        %v933 = vmax.f32 %v931, %v932
        %v934 = vrot.slane %v933, 1
        %v935 = vmax.f32 %v933, %v934
        %v936 = vmax.f32 %v876, %v881
        %v937 = vmax.f32 %v878, %v883
        %v938 = vmax.f32 %v936, %v886
        %v939 = vmax.f32 %v937, %v888
        %v940 = vmax.f32 %v938, %v891
        %v941 = vmax.f32 %v939, %v893
        %v942 = vmax.f32 %v940, %v896
        %v943 = vmax.f32 %v941, %v898
        %v944 = vmax.f32 %v942, %v901
        %v945 = vmax.f32 %v943, %v903
        %v946 = vmax.f32 %v944, %v906
        %v947 = vmax.f32 %v945, %v908
        %v948 = vmax.f32 %v946, %v911
        %v949 = vmax.f32 %v947, %v913
        %v950 = vmax.f32 %v948, %v949
        %v951 = vrot.slane %v950, 4
        %v952 = vmax.f32 %v950, %v951
        %v953 = vrot.slane %v952, 2
        %v954 = vmax.f32 %v952, %v953
        %v955 = vrot.slane %v954, 1
        %v956 = vmax.f32 %v954, %v955
        %v957 = vsub.f32 %v827, %v935
        %v958 = vsub.f32 %v876, %v956
        %v959 = vsub.f32 %v829, %v935
        %v960 = vsub.f32 %v878, %v956
        %v961 = vsub.f32 %v832, %v935
        %v962 = vsub.f32 %v881, %v956
        %v963 = vsub.f32 %v834, %v935
        %v964 = vsub.f32 %v883, %v956
        %v965 = vsub.f32 %v837, %v935
        %v966 = vsub.f32 %v886, %v956
        %v967 = vsub.f32 %v839, %v935
        %v968 = vsub.f32 %v888, %v956
        %v969 = vsub.f32 %v842, %v935
        %v970 = vsub.f32 %v891, %v956
        %v971 = vsub.f32 %v844, %v935
        %v972 = vsub.f32 %v893, %v956
        %v973 = vsub.f32 %v847, %v935
        %v974 = vsub.f32 %v896, %v956
        %v975 = vsub.f32 %v849, %v935
        %v976 = vsub.f32 %v898, %v956
        %v977 = vsub.f32 %v852, %v935
        %v978 = vsub.f32 %v901, %v956
        %v979 = vsub.f32 %v854, %v935
        %v980 = vsub.f32 %v903, %v956
        %v981 = vsub.f32 %v857, %v935
        %v982 = vsub.f32 %v906, %v956
        %v983 = vsub.f32 %v859, %v935
        %v984 = vsub.f32 %v908, %v956
        %v985 = vsub.f32 %v862, %v935
        %v986 = vsub.f32 %v911, %v956
        %v987 = vsub.f32 %v864, %v935
        %v988 = vsub.f32 %v913, %v956
        %v989 = vmul.f32 %v957, 1.442695
        %v990 = vpow.pop %v989
        %v991 = vmul.f32 %v958, 1.442695
        %v992 = vpow.pop %v991
        %v993 = vmul.f32 %v959, 1.442695
        %v994 = vpow.pop %v993
        %v995 = vmul.f32 %v960, 1.442695
        %v996 = vpow.pop %v995
        %v997 = vmul.f32 %v961, 1.442695
        %v998 = vpow.pop %v997
        %v999 = vmul.f32 %v962, 1.442695
        %v1000 = vpow.pop %v999
        %v1001 = vmul.f32 %v963, 1.442695
        %v1002 = vpow.pop %v1001
        %v1003 = vmul.f32 %v964, 1.442695
        %v1004 = vpow.pop %v1003
        %v1005 = vmul.f32 %v965, 1.442695
        %v1006 = vpow.pop %v1005
        %v1007 = vmul.f32 %v966, 1.442695
        %v1008 = vpow.pop %v1007
        %v1009 = vmul.f32 %v967, 1.442695
        %v1010 = vpow.pop %v1009
        %v1011 = vmul.f32 %v968, 1.442695
        %v1012 = vpow.pop %v1011
        %v1013 = vmul.f32 %v969, 1.442695
        %v1014 = vpow.pop %v1013
        %v1015 = vmul.f32 %v970, 1.442695
        %v1016 = vpow.pop %v1015
        %v1017 = vmul.f32 %v971, 1.442695
        %v1018 = vpow.pop %v1017
        %v1019 = vmul.f32 %v972, 1.442695
        %v1020 = vpow.pop %v1019
        %v1021 = vmul.f32 %v973, 1.442695
        %v1022 = vpow.pop %v1021
        %v1023 = vmul.f32 %v974, 1.442695
        %v1024 = vpow.pop %v1023
        %v1025 = vmul.f32 %v975, 1.442695
        %v1026 = vpow.pop %v1025
        %v1027 = vmul.f32 %v976, 1.442695
        %v1028 = vpow.pop %v1027
        %v1029 = vmul.f32 %v977, 1.442695
        %v1030 = vpow.pop %v1029
        %v1031 = vmul.f32 %v978, 1.442695
        %v1032 = vpow.pop %v1031
        %v1033 = vmul.f32 %v979, 1.442695
        %v1034 = vpow.pop %v1033
        %v1035 = vmul.f32 %v980, 1.442695
        %v1036 = vpow.pop %v1035
        %v1037 = vmul.f32 %v981, 1.442695
        %v1038 = vpow.pop %v1037
        %v1039 = vmul.f32 %v982, 1.442695
        %v1040 = vpow.pop %v1039
        %v1041 = vmul.f32 %v983, 1.442695
        %v1042 = vpow.pop %v1041
        %v1043 = vmul.f32 %v984, 1.442695
        %v1044 = vpow.pop %v1043
        %v1045 = vmul.f32 %v985, 1.442695
        %v1046 = vpow.pop %v1045
        %v1047 = vmul.f32 %v986, 1.442695
        %v1048 = vpow.pop %v1047
        %v1049 = vmul.f32 %v987, 1.442695
        %v1050 = vpow.pop %v1049
        %v1051 = vmul.f32 %v988, 1.442695
        %v1052 = vpow.pop %v1051
        %v1053 = vadd.f32 %v990, %v994
        %v1054 = vadd.f32 %v1053, %v998
        %v1055 = vadd.f32 %v1054, %v1002
        %v1056 = vadd.f32 %v1055, %v1006
        %v1057 = vadd.f32 %v1056, %v1010
        %v1058 = vadd.f32 %v1057, %v1014
        %v1059 = vadd.f32 %v1058, %v1018
        %v1060 = vadd.f32 %v1059, %v1022
        %v1061 = vadd.f32 %v1060, %v1026
        %v1062 = vadd.f32 %v1061, %v1030
        %v1063 = vadd.f32 %v1062, %v1034
        %v1064 = vadd.f32 %v1063, %v1038
        %v1065 = vadd.f32 %v1064, %v1042
        %v1066 = vadd.f32 %v1065, %v1046
        %v1067 = vadd.f32 %v1066, %v1050
        %v1068 = vrot.slane %v1067, 4
        %v1069 = vadd.f32 %v1067, %v1068
        %v1070 = vrot.slane %v1069, 2
        %v1071 = vadd.f32 %v1069, %v1070
        %v1072 = vrot.slane %v1071, 1
        %v1073 = vadd.f32 %v1071, %v1072
        %v1074 = vadd.f32 %v992, %v996
        %v1075 = vadd.f32 %v1074, %v1000
        %v1076 = vadd.f32 %v1075, %v1004
        %v1077 = vadd.f32 %v1076, %v1008
        %v1078 = vadd.f32 %v1077, %v1012
        %v1079 = vadd.f32 %v1078, %v1016
        %v1080 = vadd.f32 %v1079, %v1020
        %v1081 = vadd.f32 %v1080, %v1024
        %v1082 = vadd.f32 %v1081, %v1028
        %v1083 = vadd.f32 %v1082, %v1032
        %v1084 = vadd.f32 %v1083, %v1036
        %v1085 = vadd.f32 %v1084, %v1040
        %v1086 = vadd.f32 %v1085, %v1044
        %v1087 = vadd.f32 %v1086, %v1048
        %v1088 = vadd.f32 %v1087, %v1052
        %v1089 = vrot.slane %v1088, 4
        %v1090 = vadd.f32 %v1088, %v1089
        %v1091 = vrot.slane %v1090, 2
        %v1092 = vadd.f32 %v1090, %v1091
        %v1093 = vrot.slane %v1092, 1
        %v1094 = vadd.f32 %v1092, %v1093
        %v1095 = vld [vmem:[#allocation3] sm:$0xf]
        %v1096 = vpack.c.bf16 %v994, %v990
        %v1097 = vpack.c.bf16 %v996, %v992
        %v1098 = vpack.c.bf16 %v1002, %v998
        %v1099 = vpack.c.bf16 %v1004, %v1000
        %v1100 = vpack.c.bf16 %v1010, %v1006
        %v1101 = vpack.c.bf16 %v1012, %v1008
        %v1102 = vpack.c.bf16 %v1018, %v1014
        %v1103 = vpack.c.bf16 %v1020, %v1016
        %v1104 = vpack.c.bf16 %v1026, %v1022
        %v1105 = vpack.c.bf16 %v1028, %v1024
        %v1106 = vpack.c.bf16 %v1034, %v1030
        %v1107 = vpack.c.bf16 %v1036, %v1032
        %v1108 = vpack.c.bf16 %v1042, %v1038
        %v1109 = vpack.c.bf16 %v1044, %v1040
        %v1110 = vpack.c.bf16 %v1050, %v1046
        %v1111 = vpack.c.bf16 %v1052, %v1048
        %1112 = vmatpush.bf16.msra.mxu0 %v1110
        %1113 = vmatpush.bf16.msra.mxu0 %v1108
        %1114 = vmatpush.bf16.msra.mxu0 %v1106
        %1115 = vmatpush.bf16.msra.mxu0 %v1104
        %1116 = vmatpush.bf16.msra.mxu0 %v1102
        %1117 = vmatpush.bf16.msra.mxu0 %v1100
        %1118 = vmatpush.bf16.msra.mxu0 %v1098
        %1119 = vmatpush.bf16.msra.mxu0 %v1096
        %1120 = vmatmul.bf16.gmra.mxu0 %v1095
        %v1121 = vpop.f32.mrf.mxu0
        %v1122 = vadd.f32 0.0, %v1121
        %v1123 = vpop.f32.mrf.mxu0
        %1124 = vdwg.mxu0
        %1125 = vmatpush.bf16.msra.mxu0 %v1111
        %1126 = vmatpush.bf16.msra.mxu0 %v1109
        %1127 = vmatpush.bf16.msra.mxu0 %v1107
        %1128 = vmatpush.bf16.msra.mxu0 %v1105
        %1129 = vmatpush.bf16.msra.mxu0 %v1103
        %1130 = vmatpush.bf16.msra.mxu0 %v1101
        %1131 = vmatpush.bf16.msra.mxu0 %v1099
        %1132 = vmatpush.bf16.msra.mxu0 %v1097
        %1133 = vmatmul.bf16.gmra.mxu0 %v1095
        %v1134 = vpop.f32.mrf.mxu0
        %v1135 = vadd.f32 0.0, %v1134
        %v1136 = vpop.f32.mrf.mxu0
        %1137 = vdwg.mxu0
        %v1138 = vrcp.pop %v1073
        %v1139 = vrcp.pop %v1094
        %v1140 = vmul.f32 %v1122, %v1138
        %v1141 = vmul.f32 %v1135, %v1139
        %v1142 = vld [vmem:[%s9] sm:$0xf]
        %v1143 = vld [vmem:[%s9 + $0x4] sm:$0xf]
        %v1144 = vpack.c.bf16 %v1140, %v1140
        %v1145 = vpack.c.bf16 %v1141, %v1141
        %v1146 = vld [vmem:[%s10] sm:$0xff]
        %v1147 = vld [vmem:[%s10 + $0x8] sm:$0xff]
        %1149 = vset.pattern.permute.xlu0 0
        %1150 = vperm.xlu0 %1149, %v1146
        %v1151 = vpop.permute.xlu0 %1150
        %1154 = vset.pattern.permute.xlu0 0
        %1155 = vperm.xlu0 %1154, %v1147
        %v1156 = vpop.permute.xlu0 %1155
        %v1160 = vunpack.c.l.b16 %v1142
        %v1161 = vunpack.c.l.b16 %v1143
        %v1162 = vpack.c.b16 %v1161, %v1160
        %v1164 = vsel %vm785, %v1162, 0
        %v1167 = vsel %vm810, %v1144, 0
        %v1170 = vsel %vm810, %v1145, 0
        %1172 = vmatpush.bf16.msra.mxu0 0
        %1173 = vmatpush.bf16.msra.mxu0 0
        %1174 = vmatpush.bf16.msra.mxu0 0
        %1175 = vmatpush.bf16.msra.mxu0 0
        %1176 = vmatpush.bf16.msra.mxu0 0
        %1177 = vmatpush.bf16.msra.mxu0 0
        %1178 = vmatpush.bf16.msra.mxu0 0
        %1179 = vmatpush.bf16.msra.mxu0 %v1167
        %1180 = vmatmul.bf16.gmra.mxu0 %v1164
        %v1181 = vpop.f32.mrf.mxu0
        %v1182 = vadd.f32 %v1151, %v1181
        %v1183 = vpop.f32.mrf.mxu0
        %v1184 = vadd.f32 %v1156, %v1183
        %1185 = vdwg.mxu0
        %1186 = vmatpush.bf16.msra.mxu0 0
        %1187 = vmatpush.bf16.msra.mxu0 0
        %1188 = vmatpush.bf16.msra.mxu0 0
        %1189 = vmatpush.bf16.msra.mxu0 0
        %1190 = vmatpush.bf16.msra.mxu0 0
        %1191 = vmatpush.bf16.msra.mxu0 0
        %1192 = vmatpush.bf16.msra.mxu0 0
        %1193 = vmatpush.bf16.msra.mxu0 %v1170
        %1194 = vmatmul.bf16.gmra.mxu0 %v1164
        %v1195 = vpop.f32.mrf.mxu0
        %v1196 = vadd.f32 %v1151, %v1195
        %v1197 = vpop.f32.mrf.mxu0
        %v1198 = vadd.f32 %v1156, %v1197
        %1199 = vdwg.mxu0
        %v1200 = vadd.f32 %v1182, %v684
        %v1201 = vadd.f32 %v1196, %v685
        %v1202 = vadd.f32 %v1184, %v686
        %v1203 = vadd.f32 %v1198, %v687
        %1204 = vst [vmem:[%s458] sm:$0xff] %v1200
        %1205 = vst [vmem:[%s458 + $0x8] sm:$0xff] %v1201
        %1206 = vst [vmem:[%s458 + $0x10] sm:$0xff] %v1202
        %1207 = vst [vmem:[%s458 + $0x18] sm:$0xff] %v1203
        %s1208 = sand.u32 %s295, 1
        %s1209 = scalar_lea.sflag [#allocation6], %s1208
        %s1210 = sand.u32 %s295, 1
        %s1211 = smul.addr %s1210, 32
        %s1212 = scalar_lea.vmem [#allocation5], %s1211
        // Predicated region
        $region92: #{tpu_custom_call.1} parent=82 // pred_check
          %p1213 = pneg %p305
        $region93: #{tpu_custom_call.1} parent=82 // pred_check_branch
          %1215 = sbr.rel (%p1213) target = $region95
        $region94: #{tpu_custom_call.1} parent=82 // pred_region
          %s1216 = smul.u32 2, %s30
          %1218 = vsyncadd %s1209, 0
          %s1219 = smul.addr %s29, 8
          %s1220 = sadd.s32 %s1216, %s1219
          %s1221 = smul.addr %s1220, 8
          %s1222 = scalar_lea.hbm %s11, %s1221
          %s1223 = sshll.u32 %s1212, 4
          %s1224 = int_to_ptr.vmem [resolvable:$true] %s1223
          %s1225 = sshll.u32 %s1222, 4
          %s1226 = int_to_ptr.hbm [resolvable:$true] %s1225
          %1231 = dma.vmem_to_hbm [thread:$0]  %s1224, 512, %s1226, %s1209, 256, 512, 16
        $region95: #{tpu_custom_call.1} parent=82 // pred_fallthru
          _
      $region83: #{tpu_custom_call.1} parent=5 // pred_fallthru
        _
      %p1232 = scmp.le.s32.totalorder 2, %s20
      // Predicated region
      $region96: #{tpu_custom_call.1} parent=5 // pred_check
        %p1233 = pneg %p1232
      $region97: #{tpu_custom_call.1} parent=5 // pred_check_branch
        %1235 = sbr.rel (%p1233) target = $region99
      $region98: #{tpu_custom_call.1} parent=5 // pred_region
        %s1236 = ssub.s32 %s20, 2
        // Predicated region
        $region100: #{tpu_custom_call.1} parent=98 // pred_check
          %p1237 = pneg %p311
        $region101: #{tpu_custom_call.1} parent=98 // pred_check_branch
          %1239 = sbr.rel (%p1237) target = $region103
        $region102: #{tpu_custom_call.1} parent=98 // pred_region
          %s1240 = sand.u32 %s296, 1
          %s1241 = scalar_lea.sflag [#allocation6], %s1240
          %s1242 = sand.u32 %s296, 1
          %s1243 = smul.addr %s1242, 32
          %s1244 = scalar_lea.vmem [#allocation5], %s1243
          %1246 = dma.done %s1241, 512
        $region103: #{tpu_custom_call.1} parent=98 // pred_fallthru
          _
      $region99: #{tpu_custom_call.1} parent=5 // pred_fallthru
        _
    $region6: #{tpu_custom_call.1} parent=1 // loop_footer
      %s24 = sadd.s32 1, %s20
    $region7: #{tpu_custom_call.1} parent=1 // loop_footer_branch
      %19 = sbr.rel target = $region3
    $region8: #{tpu_custom_call.1} parent=1 // loop_exit
      _
    %1247 = vsyncpa [#allocation6], 1
    %s1248 = scalar_lea.sflag [#allocation6], 1
    %1249 = vsyncpa %s1248, 1

</llo_original>
